<compile_context>
chip_gen: v5e
topology: v5e:2x2
jax: 0.10.0
libtpu: 0.0.40
codegen_flags: <defaults>
</compile_context>

<pallas_src>
import jax
import jax.numpy as jnp
from jax.experimental import pallas as pl
from jax.experimental.pallas import tpu as pltpu


def _round_up(x: int, m: int) -> int:
    return ((x + m - 1) // m) * m


def _hw_config():
    """Per-generation pack factor / tile size / VMEM budget (conservative fallback)."""
    try:
        kind = jax.devices()[0].device_kind.lower()
    except Exception:
        kind = ""
    if "v7" in kind:
        # 64 MiB VMEM per TensorCore -> leave headroom for compiler scratch.
        return {"pack": 16, "tile_rows": 8192, "vmem_limit_bytes": 48 * 1024 * 1024}
    if "v6" in kind:
        return {"pack": 16, "tile_rows": 8192, "vmem_limit_bytes": 64 * 1024 * 1024}
    if "v5e" in kind or "v5 lite" in kind or "v5litepod" in kind:
        # 8-row pack keeps the block-diagonal's zero-FLOPs well under v5e's
        # f32 MXU ridge, so the kernel stays safely HBM-bound.
        return {"pack": 8, "tile_rows": 8192, "vmem_limit_bytes": 64 * 1024 * 1024}
    # Unknown chip (v4/v5p/interpret/...): conservative but still lane-dense.
    return {"pack": 8, "tile_rows": 8192, "vmem_limit_bytes": 32 * 1024 * 1024}


def _packed_linear_kernel(x_ref, wt_ref, o_ref):
    # x_ref:  (TILE, pack*in_feats)            -- streamed, lane-dense tile
    # wt_ref: (pack*in_feats, pack*out_feats)  -- block-diagonal W^T, resident
    # o_ref:  (TILE, pack*out_feats)
    o_ref[...] = jnp.dot(
        x_ref[...], wt_ref[...], preferred_element_type=jnp.float32
    ).astype(o_ref.dtype)


def net2_forward(
    x,
    weight,
    *,
    tile_rows: int | None = None,      # tile size in *packed* rows
    min_pallas_rows: int = 2048,       # below this, fall back to XLA fused dot
    pack: int | None = None,           # row-pack factor (8 or 16)
    vmem_limit_bytes: int | None = None,
):
    """Pallas implementation of Net2.forward.

    x:      (N, 16) float32 node features (g.ndata['h'])
    weight: (7, 16) float32 -- nn.Linear(16, 7, bias=False).weight
    returns (N, 7) float32 == x @ weight.T
    """
    n, in_feats = x.shape
    out_feats, in_feats_w = weight.shape
    assert in_feats == in_feats_w

    # Tiny inputs: per-row work is 224 FLOPs / 92 bytes -- the custom-call and
    # DMA-launch overhead dominates, so let XLA's fused dot handle it.
    if n < min_pallas_rows:
        return jnp.dot(x, weight.T)

    cfg = _hw_config()
    if pack is None:
        pack = cfg["pack"]
    if tile_rows is None:
        tile_rows = cfg["tile_rows"]
    if vmem_limit_bytes is None:
        vmem_limit_bytes = cfg["vmem_limit_bytes"]

    # Pad N to a multiple of the pack factor so the row-pack reshape is exact.
    # Padded rows are zero -> produce zero outputs -> truncated below.
    n_pad = _round_up(n, pack)
    if n_pad != n:
        x = jnp.pad(x, ((0, n_pad - n), (0, 0)))

    packed_n = n_pad // pack
    k = pack * in_feats    # 128 (pack=8) or 256 (pack=16)  -- lane-dense input
    m = pack * out_feats   # 56  (pack=8) or 112 (pack=16)  -- near-dense output

    # Free row-major view: packed row r holds original rows r*pack .. r*pack+pack-1.
    x_packed = x.reshape(packed_n, k)

    # Block-diagonal W^T: (k, m) with weight.T on the diagonal blocks, so
    # x_packed @ wt_bd computes the per-row x @ W^T without cross-row mixing.
    # Under jit with a constant weight this folds to a compile-time constant.
    wt_bd = jnp.kron(jnp.eye(pack, dtype=weight.dtype), weight.T)

    # Tile selection: big tiles to amortize the ~0.35us per-step overhead,
    # clamped to the problem size, and clamped so large inputs always give
    # >= 2 roughly balanced grid steps (needed for v7x's two TensorCores to
    # each stream half the rows; harmless elsewhere).
    tile = min(tile_rows, _round_up(packed_n, 8))
    if packed_n >= 16:
        tile = min(tile, _round_up(pl.cdiv(packed_n, 2), 8))
    grid = (pl.cdiv(packed_n, tile),)

    cost = pl.CostEstimate(
        flops=2 * packed_n * k * m,
        transcendentals=0,
        bytes_accessed=4 * (packed_n * k + k * m + packed_n * m),
    )

    out_packed = pl.pallas_call(
        _packed_linear_kernel,
        out_shape=jax.ShapeDtypeStruct((packed_n, m), x.dtype),
        grid=grid,
        in_specs=[
            pl.BlockSpec((tile, k), lambda i: (i, 0)),
            # Constant index_map -> block-diagonal weight stays resident in VMEM.
            pl.BlockSpec((k, m), lambda i: (0, 0)),
        ],
        out_specs=pl.BlockSpec((tile, m), lambda i: (i, 0)),
        compiler_params=pltpu.CompilerParams(
            dimension_semantics=("parallel",),
            vmem_limit_bytes=vmem_limit_bytes,
        ),
        cost_estimate=cost,
    )(x_packed, wt_bd)

    # Unpack (free view) and drop padding rows.
    out = out_packed.reshape(n_pad, out_feats)
    if n_pad != n:
        out = out[:n]
    return out


if __name__ == "__main__":
    # TODO(synk): the DGL graph object (g.ndata / apply_nodes) carries no math
    # here (no message passing), so only the per-node Linear(16, 7, bias=False)
    # is implemented; the graph structure itself is not represented.
    key = jax.random.PRNGKey(0)
    k_x, k_w = jax.random.split(key)

    num_nodes = 1000   # not a multiple of pack or tile: exercises padding + ragged block
    in_feats = 16
    out_feats = 7

    # Node features (what would be g.ndata['h'] / x in PyTorch).
    x = jax.random.normal(k_x, (num_nodes, in_feats), dtype=jnp.float32)

    # Deterministic init of nn.Linear(16, 7, bias=False).weight, shape (out, in),
    # mimicking the uniform(-1/sqrt(in), 1/sqrt(in)) default range.
    bound = 1.0 / jnp.sqrt(jnp.float32(in_feats))
    weight = jax.random.uniform(
        k_w, (out_feats, in_feats), dtype=jnp.float32, minval=-bound, maxval=bound
    )

    ref = x @ weight.T

    # Packed Pallas path (forced despite small N via min_pallas_rows=0).
    out_pallas = net2_forward(x, weight, min_pallas_rows=0)
    out_pallas = jax.block_until_ready(out_pallas)
    assert out_pallas.shape == (num_nodes, out_feats)
    assert jnp.allclose(out_pallas, ref, atol=1e-5, rtol=1e-5)

    # Multi-step streaming path with a tiny tile (several grid steps, ragged last block).
    out_tiled = net2_forward(x, weight, min_pallas_rows=0, tile_rows=16)
    out_tiled = jax.block_until_ready(out_tiled)
    assert out_tiled.shape == (num_nodes, out_feats)
    assert jnp.allclose(out_tiled, ref, atol=1e-5, rtol=1e-5)

    # Default path: small-N fallback to XLA's fused dot (still must match).
    out_default = net2_forward(x, weight)
    out_default = jax.block_until_ready(out_default)
    assert out_default.shape == (num_nodes, out_feats)
    assert jnp.allclose(out_default, ref, atol=1e-5, rtol=1e-5)

    print("KERNEL_OK")
</pallas_src>

<mosaic_0001>
module attributes {stable_mosaic.version = 11 : i64} {
  func.func @_packed_linear_kernel(%arg0: i32, %arg1: memref<64x128xf32, #tpu.memory_space<vmem>>, %arg2: memref<128x56xf32, #tpu.memory_space<vmem>>, %arg3: memref<64x56xf32, #tpu.memory_space<vmem>>) attributes {dimension_semantics = [#tpu.dimension_semantics<parallel>], iteration_bounds = array<i64: 2>, scalar_prefetch = 0 : i64, scratch_operands = 0 : i64, tpu.core_type = #tpu.core_type<tc>, window_params = [{transform_indices = @transform_0, window_bounds = array<i64: 64, 128>}, {pipeline_mode = #tpu.pipeline_mode<synchronous>, transform_indices = @transform_1, window_bounds = array<i64: 128, 56>}, {transform_indices = @transform_2, window_bounds = array<i64: 64, 56>}]} {
    %c0 = arith.constant 0 : index
    %c0_0 = arith.constant 0 : index
    %0 = vector.load %arg1[%c0, %c0_0] : memref<64x128xf32, #tpu.memory_space<vmem>>, vector<64x128xf32>
    %c0_1 = arith.constant 0 : index
    %c0_2 = arith.constant 0 : index
    %1 = vector.load %arg2[%c0_1, %c0_2] : memref<128x56xf32, #tpu.memory_space<vmem>>, vector<128x56xf32>
    %cst = arith.constant dense<0.000000e+00> : vector<64x56xf32>
    %2 = tpu.matmul %0, %1, %cst {dimension_numbers = #tpu.dot_dimension_numbers<[1], [0], [0], [1], [0, 0, 1, 1], [], []>} : vector<64x128xf32>, vector<128x56xf32>, vector<64x56xf32> -> vector<64x56xf32>
    %c0_3 = arith.constant 0 : index
    %c0_4 = arith.constant 0 : index
    %3 = vector.load %arg3[%c0_3, %c0_4] : memref<64x56xf32, #tpu.memory_space<vmem>>, vector<64x56xf32>
    tpu.vector_store %arg3[%c0_3, %c0_4], %2 {strides = array<i32>} : memref<64x56xf32, #tpu.memory_space<vmem>>, vector<64x56xf32>,
    return
  }
  func.func @transform_0(%arg0: i32) -> (i32, i32) {
    %c0_i32 = arith.constant 0 : i32
    %c0_i32_0 = arith.constant 0 : i32
    return %arg0, %c0_i32 : i32, i32
  }
  func.func @transform_1(%arg0: i32) -> (i32, i32) {
    %c0_i32 = arith.constant 0 : i32
    %c0_i32_0 = arith.constant 0 : i32
    %c0_i32_1 = arith.constant 0 : i32
    return %c0_i32, %c0_i32_0 : i32, i32
  }
  func.func @transform_2(%arg0: i32) -> (i32, i32) {
    %c0_i32 = arith.constant 0 : i32
    %c0_i32_0 = arith.constant 0 : i32
    return %arg0, %c0_i32 : i32, i32
  }
}

</mosaic_0001>

<llo_original>
// kernel: tpu_custom_call.1
$region0: #{tpu_custom_call.1}
  #allocation0 [shape = 'u32[]', space=smem, size = 0x4, offset = 0x4, fixed_abs, tag = 'smem constant byte address 0x4 - core index']
  #allocation1 [shape = 'u32[72,128]{1,0:T(1,128)}', space=vmem, size = 0x9000, scoped, tag = 'internal scratch']
  %s0 = inlined_call_operand.vmem [shape: f32[125,128], index: 0, kind: input, shape index: {}]
  %s1 = inlined_call_operand.vmem [shape: f32[128,56], index: 1, kind: input, shape index: {}]
  %s2 = inlined_call_operand.vmem [shape: f32[125,56], index: 2, kind: output, shape index: {}]
  %s3 = sld [smem:[#allocation0]]
  $region41: #{tpu_custom_call.1} parent=0
    _
  %s5 = ssub.s32 1, %s3
  %s6 = scalar_select 0, %s5, %s3
  loop: start=0, step=1, limit=4
  $region2: #{tpu_custom_call.1} parent=0 // loop_pre_header
    _
  $region3: #{tpu_custom_call.1} parent=0 // loop_header
    %s8 = sphi 0, %s12
    %p9 = scmp.ge.s32.totalorder %s8, 4
    %s18 = sphi 0, %s20
    %s21 = sphi 0, %s18
    %s22 = sphi 0, %s21
    %s38 = sphi 0, %s22
    %s42 = sphi 0, %s42
    %s44 = sphi 0, %s42
    %s45 = sphi 0, %s44
    %s59 = sphi 0, %s45
    %s65 = sphi 0, %s67
    %s68 = sphi 0, %s65
    %s69 = sphi 0, %s68
    %s85 = sphi 0, %s69
  $region4: #{tpu_custom_call.1} parent=0 // loop_header_branch
    %11 = sbr.rel (%p9) target = $region8
  $region5: #{tpu_custom_call.1} parent=0 // loop_body
    %s13 = ssub.s32 %s8, 1
    %s14 = ssub.s32 %s8, 2
    %s15 = sadd.s32 %s8, 1
    %s16 = ssub.s32 %s8, %s15
    %p17 = scmp.eq.s32.totalorder %s16, 0
    %s19 = sadd.s32 %s18, 1
    %s20 = scalar_select %p17, %s18, %s19
    %p23 = pneg %p17
    %p24 = scmp.eq.s32.totalorder %s8, 1
    %p25 = por %p23, %p24
    %p26 = scmp.ne.s32.totalorder %s18, %s21
    %p27 = scmp.eq.s32.totalorder %s8, 0
    %p28 = por %p26, %p27
    %p29 = scmp.ne.s32.totalorder %s18, %s21
    %p30 = scmp.eq.s32.totalorder %s13, 1
    %p31 = por %p29, %p30
    %p32 = scmp.ne.s32.totalorder %s21, %s22
    %p33 = scmp.eq.s32.totalorder %s13, 0
    %p34 = por %p32, %p33
    %p35 = scmp.ne.s32.totalorder %s21, %s22
    %p36 = scmp.eq.s32.totalorder %s14, 1
    %p37 = por %p35, %p36
    %p39 = scmp.ne.s32.totalorder %s22, %s38
    %p40 = scmp.eq.s32.totalorder %s14, 0
    %p41 = por %p39, %p40
    %s43 = sadd.s32 %s42, 1
    %p46 = scmp.eq.s32.totalorder %s8, 1
    %p47 = scmp.ne.s32.totalorder %s42, %s44
    %p48 = scmp.eq.s32.totalorder %s8, 0
    %p49 = por %p47, %p48
    %p50 = scmp.ne.s32.totalorder %s42, %s44
    %p51 = scmp.eq.s32.totalorder %s13, 1
    %p52 = por %p50, %p51
    %p53 = scmp.ne.s32.totalorder %s44, %s45
    %p54 = scmp.eq.s32.totalorder %s13, 0
    %p55 = por %p53, %p54
    %p56 = scmp.ne.s32.totalorder %s44, %s45
    %p57 = scmp.eq.s32.totalorder %s14, 1
    %p58 = por %p56, %p57
    %p60 = scmp.ne.s32.totalorder %s45, %s59
    %p61 = scmp.eq.s32.totalorder %s14, 0
    %p62 = por %p60, %p61
    %s63 = ssub.s32 %s8, %s15
    %p64 = scmp.eq.s32.totalorder %s63, 0
    %s66 = sadd.s32 %s65, 1
    %s67 = scalar_select %p64, %s65, %s66
    %p70 = pneg %p64
    %p71 = scmp.eq.s32.totalorder %s8, 1
    %p72 = por %p70, %p71
    %p73 = scmp.ne.s32.totalorder %s65, %s68
    %p74 = scmp.eq.s32.totalorder %s8, 0
    %p75 = por %p73, %p74
    %p76 = scmp.ne.s32.totalorder %s65, %s68
    %p77 = scmp.eq.s32.totalorder %s13, 1
    %p78 = por %p76, %p77
    %p79 = scmp.ne.s32.totalorder %s68, %s69
    %p80 = scmp.eq.s32.totalorder %s13, 0
    %p81 = por %p79, %p80
    %p82 = scmp.ne.s32.totalorder %s68, %s69
    %p83 = scmp.eq.s32.totalorder %s14, 1
    %p84 = por %p82, %p83
    %p86 = scmp.ne.s32.totalorder %s69, %s85
    %p87 = scmp.eq.s32.totalorder %s14, 0
    %p88 = por %p86, %p87
    %p89 = scmp.le.s32.totalorder 1, %s8
    %p90 = scmp.lt.s32.totalorder %s8, 3
    %p91 = pnand %p89, %p90
    %p92 = pneg %p91
    // Predicated region
    $region9: #{tpu_custom_call.1} parent=5 // pred_check
      _
    $region10: #{tpu_custom_call.1} parent=5 // pred_check_branch
      %94 = sbr.rel (%p91) target = $region12
    $region11: #{tpu_custom_call.1} parent=5 // pred_region
      %s95 = ssub.s32 %s8, 1
      // Predicated region
      $region13: #{tpu_custom_call.1} parent=11 // pred_check
        %p96 = pneg %p55
      $region14: #{tpu_custom_call.1} parent=11 // pred_check_branch
        %98 = sbr.rel (%p96) target = $region16
      $region15: #{tpu_custom_call.1} parent=11 // pred_region
        _
      $region16: #{tpu_custom_call.1} parent=11 // pred_fallthru
        _
    $region12: #{tpu_custom_call.1} parent=5 // pred_fallthru
      _
    %p99 = scmp.lt.s32.totalorder %s8, 2
    // Predicated region
    $region17: #{tpu_custom_call.1} parent=5 // pred_check
      %p100 = pneg %p99
    $region18: #{tpu_custom_call.1} parent=5 // pred_check_branch
      %102 = sbr.rel (%p100) target = $region20
    $region19: #{tpu_custom_call.1} parent=5 // pred_region
      // Predicated region
      $region21: #{tpu_custom_call.1} parent=19 // pred_check
        %p103 = pneg %p28
      $region22: #{tpu_custom_call.1} parent=19 // pred_check_branch
        %105 = sbr.rel (%p103) target = $region24
      $region23: #{tpu_custom_call.1} parent=19 // pred_region
        %s106 = smul.u32 8, %s8
        %p107 = scmp.lt.s32.totalorder %s106, 15
        %s108 = scalar_select %p107, %s106, 15
        %s109 = smul.addr %s108, 8
        %s110 = scalar_lea.vmem %s0, %s109
        %s111 = smul.u32 8, %s8
      $region24: #{tpu_custom_call.1} parent=19 // pred_fallthru
        _
    $region20: #{tpu_custom_call.1} parent=5 // pred_fallthru
      _
    %p112 = scmp.le.s32.totalorder 1, %s8
    %p113 = scmp.lt.s32.totalorder %s8, 3
    %p114 = pnand %p112, %p113
    %p115 = pneg %p114
    // Predicated region
    $region25: #{tpu_custom_call.1} parent=5 // pred_check
      _
    $region26: #{tpu_custom_call.1} parent=5 // pred_check_branch
      %117 = sbr.rel (%p114) target = $region28
    $region27: #{tpu_custom_call.1} parent=5 // pred_region
      %s118 = ssub.s32 %s8, 1
      %s119 = smul.u32 8, %s13
      %p120 = scmp.lt.s32.totalorder %s119, 15
      %s121 = scalar_select %p120, %s119, 15
      %s122 = smul.addr %s121, 8
      %s123 = scalar_lea.vmem %s0, %s122
      %p124 = pneg %p34
      %p125 = pneg %p31
      %p126 = pneg %p55
      %p127 = pneg %p52
      %p128 = pneg %p81
      %p129 = pneg %p78
      %s130 = smul.u32 8, %s13
      %p131 = scmp.lt.s32.totalorder %s130, 15
      %s132 = scalar_select %p131, %s130, 15
      %s133 = smul.addr %s132, 8
      %s134 = scalar_lea.vmem %s2, %s133
      %s135 = smul.u32 8, %s13
      %p136 = scmp.lt.s32.totalorder %s135, 15
      %s137 = scalar_select %p136, %s135, 15
      %s138 = smul.addr %s137, 8
      %s139 = scalar_lea.vmem %s0, %s138
      %s140 = smul.u32 8, %s13
      %s141 = smul.u32 8, %s13
      %p142 = scmp.lt.s32.totalorder %s141, 15
      %s143 = scalar_select %p142, %s141, 15
      %s144 = smul.addr %s143, 8
      %s145 = scalar_lea.vmem %s2, %s144
      %s146 = smul.u32 8, %s13
      %v147 = vld [vmem:[%s139] sm:$0xff]
      %v148 = vld [vmem:[%s139 + $0x8] sm:$0xff]
      %v149 = vld [vmem:[%s139 + $0x10] sm:$0xff]
      %v150 = vld [vmem:[%s139 + $0x18] sm:$0xff]
      %v151 = vld [vmem:[%s139 + $0x20] sm:$0xff]
      %v152 = vld [vmem:[%s139 + $0x28] sm:$0xff]
      %v153 = vld [vmem:[%s139 + $0x30] sm:$0xff]
      %v154 = vld [vmem:[%s139 + $0x38] sm:$0xff]
      %v155 = vld [vmem:[%s1] sm:$0xff]
      %v156 = vld [vmem:[%s1 + $0x8] sm:$0xff]
      %v157 = vld [vmem:[%s1 + $0x10] sm:$0xff]
      %v158 = vld [vmem:[%s1 + $0x18] sm:$0xff]
      %v159 = vld [vmem:[%s1 + $0x20] sm:$0xff]
      %v160 = vld [vmem:[%s1 + $0x28] sm:$0xff]
      %v161 = vld [vmem:[%s1 + $0x30] sm:$0xff]
      %v162 = vld [vmem:[%s1 + $0x38] sm:$0xff]
      %v163 = vld [vmem:[%s1 + $0x40] sm:$0xff]
      %v164 = vld [vmem:[%s1 + $0x48] sm:$0xff]
      %v165 = vld [vmem:[%s1 + $0x50] sm:$0xff]
      %v166 = vld [vmem:[%s1 + $0x58] sm:$0xff]
      %v167 = vld [vmem:[%s1 + $0x60] sm:$0xff]
      %v168 = vld [vmem:[%s1 + $0x68] sm:$0xff]
      %v169 = vld [vmem:[%s1 + $0x70] sm:$0xff]
      %v170 = vld [vmem:[%s1 + $0x78] sm:$0xff]
      %171 = vmatpush.msra.mxu0 %v170
      %172 = vmatpush.msra.mxu0 %v169
      %173 = vmatpush.msra.mxu0 %v168
      %174 = vmatpush.msra.mxu0 %v167
      %175 = vmatpush.msra.mxu0 %v166
      %176 = vmatpush.msra.mxu0 %v165
      %177 = vmatpush.msra.mxu0 %v164
      %178 = vmatpush.msra.mxu0 %v163
      %179 = vmatpush.msra.mxu0 %v162
      %180 = vmatpush.msra.mxu0 %v161
      %181 = vmatpush.msra.mxu0 %v160
      %182 = vmatpush.msra.mxu0 %v159
      %183 = vmatpush.msra.mxu0 %v158
      %184 = vmatpush.msra.mxu0 %v157
      %185 = vmatpush.msra.mxu0 %v156
      %186 = vmatpush.msra.mxu0 %v155
      %187 = vmatmul.f32.gmra.mxu0 %v147
      %v188 = vpop.f32.mrf.mxu0
      %v189 = vadd.f32 0.0, %v188
      %190 = vmatmul.f32.gmra.mxu0 %v148
      %v191 = vpop.f32.mrf.mxu0
      %v192 = vadd.f32 0.0, %v191
      %193 = vmatmul.f32.gmra.mxu0 %v149
      %v194 = vpop.f32.mrf.mxu0
      %v195 = vadd.f32 0.0, %v194
      %196 = vmatmul.f32.gmra.mxu0 %v150
      %v197 = vpop.f32.mrf.mxu0
      %v198 = vadd.f32 0.0, %v197
      %199 = vmatmul.f32.gmra.mxu0 %v151
      %v200 = vpop.f32.mrf.mxu0
      %v201 = vadd.f32 0.0, %v200
      %202 = vmatmul.f32.gmra.mxu0 %v152
      %v203 = vpop.f32.mrf.mxu0
      %v204 = vadd.f32 0.0, %v203
      %205 = vmatmul.f32.gmra.mxu0 %v153
      %v206 = vpop.f32.mrf.mxu0
      %v207 = vadd.f32 0.0, %v206
      %208 = vmatmul.f32.gmra.mxu0 %v154
      %v209 = vpop.f32.mrf.mxu0
      %v210 = vadd.f32 0.0, %v209
      %211 = vdwg.mxu0
      %vm212 = vcmask 457728
      %213 = vst.msk [vmem:[%s145] sm:$0xff] %vm212, %v189
      %214 = vst.msk [vmem:[%s145 + $0x8] sm:$0xff] %vm212, %v192
      %215 = vst.msk [vmem:[%s145 + $0x10] sm:$0xff] %vm212, %v195
      %216 = vst.msk [vmem:[%s145 + $0x18] sm:$0xff] %vm212, %v198
      %217 = vst.msk [vmem:[%s145 + $0x20] sm:$0xff] %vm212, %v201
      %218 = vst.msk [vmem:[%s145 + $0x28] sm:$0xff] %vm212, %v204
      %219 = vst.msk [vmem:[%s145 + $0x30] sm:$0xff] %vm212, %v207
      %220 = vst.msk [vmem:[%s145 + $0x38] sm:$0xff] %vm212, %v210
      %s221 = smul.u32 8, %s13
      %p222 = scmp.lt.s32.totalorder %s221, 15
      %s223 = scalar_select %p222, %s221, 15
      %s224 = smul.addr %s223, 8
      %s225 = scalar_lea.vmem %s2, %s224
      // Predicated region
      $region29: #{tpu_custom_call.1} parent=27 // pred_check
        %p226 = pneg %p78
      $region30: #{tpu_custom_call.1} parent=27 // pred_check_branch
        %228 = sbr.rel (%p226) target = $region32
      $region31: #{tpu_custom_call.1} parent=27 // pred_region
        %s229 = smul.u32 8, %s13
      $region32: #{tpu_custom_call.1} parent=27 // pred_fallthru
        _
    $region28: #{tpu_custom_call.1} parent=5 // pred_fallthru
      _
    %p230 = scmp.le.s32.totalorder 2, %s8
    // Predicated region
    $region33: #{tpu_custom_call.1} parent=5 // pred_check
      %p231 = pneg %p230
    $region34: #{tpu_custom_call.1} parent=5 // pred_check_branch
      %233 = sbr.rel (%p231) target = $region36
    $region35: #{tpu_custom_call.1} parent=5 // pred_region
      %s234 = ssub.s32 %s8, 2
      // Predicated region
      $region37: #{tpu_custom_call.1} parent=35 // pred_check
        %p235 = pneg %p84
      $region38: #{tpu_custom_call.1} parent=35 // pred_check_branch
        %237 = sbr.rel (%p235) target = $region40
      $region39: #{tpu_custom_call.1} parent=35 // pred_region
        %s238 = smul.u32 8, %s14
        %p239 = scmp.lt.s32.totalorder %s238, 15
        %s240 = scalar_select %p239, %s238, 15
        %s241 = smul.addr %s240, 8
        %s242 = scalar_lea.vmem %s2, %s241
      $region40: #{tpu_custom_call.1} parent=35 // pred_fallthru
        _
    $region36: #{tpu_custom_call.1} parent=5 // pred_fallthru
      _
  $region6: #{tpu_custom_call.1} parent=0 // loop_footer
    %s12 = sadd.s32 1, %s8
  $region7: #{tpu_custom_call.1} parent=0 // loop_footer_branch
    %7 = sbr.rel target = $region3
  $region8: #{tpu_custom_call.1} parent=0 // loop_exit
    _

</llo_original>
